<compile_context>
chip_gen: v6e
topology: v6e:2x2x1
jax: 0.10.0
libtpu: 0.0.40
codegen_flags: <defaults>
</compile_context>

<pallas_src>
import functools

import jax
import jax.numpy as jnp
from jax.experimental import pallas as pl
from jax.experimental.pallas import tpu as pltpu


# ---------------------------------------------------------------------------
# helpers
# ---------------------------------------------------------------------------
def _pick_tile(dim, preferred, unit):
    """Largest multiple of `unit` that divides `dim` and is <= preferred."""
    if dim <= preferred:
        return dim
    t = (preferred // unit) * unit
    while t >= unit:
        if dim % t == 0:
            return t
        t -= unit
    return dim


def _vmem_limit_bytes():
    """Per-generation scoped-VMEM budget: ~3/4 of physical, capped at 100 MiB.

    v5e/v6e (128 MiB) -> 96 MiB;  v7x (64 MiB) -> 48 MiB;  fallback 48 MiB.
    """
    try:
        cap = int(pltpu.get_tpu_info().vmem_capacity_bytes)
        if cap <= 0:
            raise ValueError("bad vmem capacity")
    except Exception:
        cap = 64 * 1024 * 1024
    return int(min(cap * 3 // 4, 100 * 1024 * 1024))


# ---------------------------------------------------------------------------
# Fused fast path: fc -> argmax -> group stats -> normalize + affine
# (single kernel, everything resident; used when the whole problem fits VMEM)
# ---------------------------------------------------------------------------
def _fused_kernel(x_ref, w1_ref, b1_ref, w2_ref, b2_ref, gam_ref, bet_ref,
                  o_ref, *, n_groups, eps):
    x = x_ref[...]                                           # (M, D) f32
    d = x.shape[1]

    h = jnp.dot(x.astype(jnp.bfloat16), w1_ref[...],
                preferred_element_type=jnp.float32) + b1_ref[...]
    logits = jnp.dot(h.astype(jnp.bfloat16), w2_ref[...],
                     preferred_element_type=jnp.float32) + b2_ref[...]
    gp = logits.shape[1]
    col = jax.lax.broadcasted_iota(jnp.int32, logits.shape, 1)
    logits = jnp.where(col < n_groups, logits, jnp.float32(-1e30))

    # First-occurrence argmax (== argmax of softmax(logits)).
    lmax = jnp.max(logits, axis=1, keepdims=True)
    first_max = jnp.min(jnp.where(logits == lmax, col, gp),
                        axis=1, keepdims=True)               # (M, 1) int32
    onehot = (col == first_max).astype(jnp.float32)          # (M, GP)

    # Per-row and per-group statistics (f32).
    rsum = jnp.sum(x, axis=1, keepdims=True)                 # (M, 1)
    rsq = jnp.sum(x * x, axis=1, keepdims=True)
    gsum = jnp.sum(onehot * rsum, axis=0, keepdims=True)     # (1, GP)
    gsq = jnp.sum(onehot * rsq, axis=0, keepdims=True)
    gcnt = jnp.sum(onehot, axis=0, keepdims=True) * jnp.float32(d)

    mean_g = gsum / jnp.maximum(gcnt, 1.0)
    var_g = (gsq - gsum * mean_g) / jnp.maximum(gcnt - 1.0, 1.0)   # unbiased
    inv_g = jax.lax.rsqrt(var_g + jnp.float32(eps))

    # Scatter group mean / inv_std back to rows and fold with gamma/beta.
    mean_row = jnp.sum(onehot * mean_g, axis=1, keepdims=True)     # (M, 1)
    inv_row = jnp.sum(onehot * inv_g, axis=1, keepdims=True)

    a = inv_row * gam_ref[...]
    b = bet_ref[...] - mean_row * a
    o_ref[...] = x * a + b


# ---------------------------------------------------------------------------
# Two-pass path, pass 1: fc -> argmax index + per-M-tile group statistics
# grid = (M tiles ["parallel"], K tiles ["arbitrary", innermost])
# ---------------------------------------------------------------------------
def _fc_assign_stats_kernel(x_ref, w1_ref, b1_ref, w2_ref, b2_ref,
                            idx_ref, stats_ref,
                            h_acc, rsum_acc, rsq_acc, *, n_groups):
    k = pl.program_id(1)          # reduction over D of Linear #1 (innermost)
    nk = pl.num_programs(1)

    @pl.when(k == 0)
    def _():
        h_acc[...] = jnp.zeros_like(h_acc)
        rsum_acc[...] = jnp.zeros_like(rsum_acc)
        rsq_acc[...] = jnp.zeros_like(rsq_acc)

    xb = x_ref[...]                                          # (tm, tk) f32
    # Linear #1 partial over K: bf16 MXU operands, f32 accumulation.
    h_acc[...] += jnp.dot(xb.astype(jnp.bfloat16), w1_ref[...],
                          preferred_element_type=jnp.float32)
    # Per-row partial sums (xb already resident for the matmul).
    rsum_acc[...] += jnp.sum(xb, axis=1, keepdims=True)
    rsq_acc[...] += jnp.sum(xb * xb, axis=1, keepdims=True)

    # NOTE: idx_ref / stats_ref are written only at the last K step; this
    # relies on K being the innermost (fastest-varying) grid axis.
    @pl.when(k == nk - 1)
    def _():
        h = h_acc[...] + b1_ref[...]                         # (tm, D) f32
        logits = jnp.dot(h.astype(jnp.bfloat16), w2_ref[...],
                         preferred_element_type=jnp.float32) + b2_ref[...]
        gp = logits.shape[1]
        col = jax.lax.broadcasted_iota(jnp.int32, logits.shape, 1)
        logits = jnp.where(col < n_groups, logits, jnp.float32(-1e30))
        lmax = jnp.max(logits, axis=1, keepdims=True)
        first_max = jnp.min(jnp.where(logits == lmax, col, gp),
                            axis=1, keepdims=True)           # (tm, 1) int32
        idx_ref[...] = first_max.astype(jnp.int32)

        onehot = (col == first_max).astype(jnp.float32)      # (tm, GP)
        gsum = jnp.sum(onehot * rsum_acc[...], axis=0, keepdims=True)
        gsq = jnp.sum(onehot * rsq_acc[...], axis=0, keepdims=True)
        gcnt = jnp.sum(onehot, axis=0, keepdims=True)        # rows per group
        stats_ref[0] = jnp.concatenate(
            [gsum, gsq, gcnt, jnp.zeros((5, gp), jnp.float32)], axis=0)


# ---------------------------------------------------------------------------
# Two-pass path, pass 2: single-FMA normalize + channel affine
# (mean / inv_std / gamma / beta folded into per-row (a, b) by the glue)
# ---------------------------------------------------------------------------
def _scale_shift_kernel(x_ref, a_ref, b_ref, o_ref):
    o_ref[...] = x_ref[...] * a_ref[...] + b_ref[...]


# ---------------------------------------------------------------------------
# Wrapper
# ---------------------------------------------------------------------------
def proposed_ver_instance_forward(x, params, *, group, eps=1e-5,
                                  force_two_pass=False):
    N, C, H, W = x.shape
    D = H * W
    M = N * C
    GP = max(128, ((group + 127) // 128) * 128)       # lane-padded group dim

    xv = x.reshape(M, D).astype(jnp.float32)

    # MXU operands in bf16 (halves W1 HBM/VMEM traffic, native MXU rate).
    w1t = params["w1"].T.astype(jnp.bfloat16)                        # (D, D)
    b1 = params["b1"].reshape(1, D).astype(jnp.float32)
    w2t = jnp.zeros((D, GP), jnp.bfloat16).at[:, :group].set(
        params["w2"].T.astype(jnp.bfloat16))                         # (D, GP)
    b2 = jnp.zeros((1, GP), jnp.float32).at[:, :group].set(
        params["b2"].reshape(1, group).astype(jnp.float32))

    gamma_row = jnp.tile(params["weight"].reshape(C).astype(jnp.float32),
                         N).reshape(M, 1)
    beta_row = jnp.tile(params["bias"].reshape(C).astype(jnp.float32),
                        N).reshape(M, 1)

    vmem_limit = _vmem_limit_bytes()

    # ---- fused single-kernel fast path (nominal / small shapes) ----------
    fused_bytes = ((3 * M * D + 2 * M * GP + 2 * M) * 4
                   + D * D * 2 + D * GP * 2)
    if (not force_two_pass
            and fused_bytes <= min(vmem_limit // 2, 24 * 1024 * 1024)):
        kernel = functools.partial(_fused_kernel, n_groups=group, eps=eps)
        out = pl.pallas_call(
            kernel,
            grid=(1,),
            in_specs=[
                pl.BlockSpec((M, D), lambda i: (0, 0)),      # xv
                pl.BlockSpec((D, D), lambda i: (0, 0)),      # W1^T (bf16)
                pl.BlockSpec((1, D), lambda i: (0, 0)),      # b1
                pl.BlockSpec((D, GP), lambda i: (0, 0)),     # W2^T (bf16, padded)
                pl.BlockSpec((1, GP), lambda i: (0, 0)),     # b2 (padded)
                pl.BlockSpec((M, 1), lambda i: (0, 0)),      # gamma per row
                pl.BlockSpec((M, 1), lambda i: (0, 0)),      # beta per row
            ],
            out_specs=pl.BlockSpec((M, D), lambda i: (0, 0)),
            out_shape=jax.ShapeDtypeStruct((M, D), jnp.float32),
            compiler_params=pltpu.CompilerParams(
                dimension_semantics=("arbitrary",),
                vmem_limit_bytes=vmem_limit),
        )(xv, w1t, b1, w2t, b2, gamma_row, beta_row)
        return out.reshape(N, C, H, W)

    # ---- two-pass path ----------------------------------------------------
    # Pass 1 tile plan: W1 resident when it fits (tk = D -> constant index_map
    # -> DMA'd exactly once), else K-tiled with a large M tile.
    w1_resident = (D * D * 2) <= min(vmem_limit // 3, 20 * 1024 * 1024)
    tk = D if w1_resident else _pick_tile(D, 512, 128)
    tm1_pref = max(8, min(512, (8 * 1024 * 1024) // max(D * 4, 1)))
    tm1_pref = max(8, (tm1_pref // 8) * 8)
    tm1 = _pick_tile(M, tm1_pref, 8)
    mtiles = M // tm1
    ktiles = D // tk

    kernel1 = functools.partial(_fc_assign_stats_kernel, n_groups=group)
    idx, stats_tiles = pl.pallas_call(
        kernel1,
        grid=(mtiles, ktiles),
        in_specs=[
            pl.BlockSpec((tm1, tk), lambda i, k: (i, k)),    # x tile
            pl.BlockSpec((tk, D), lambda i, k: (k, 0)),      # W1^T (resident if tk==D)
            pl.BlockSpec((1, D), lambda i, k: (0, 0)),       # b1
            pl.BlockSpec((D, GP), lambda i, k: (0, 0)),      # W2^T
            pl.BlockSpec((1, GP), lambda i, k: (0, 0)),      # b2
        ],
        out_specs=[
            pl.BlockSpec((tm1, 1), lambda i, k: (i, 0)),     # per-row argmax idx
            pl.BlockSpec((1, 8, GP), lambda i, k: (i, 0, 0)),  # per-tile stats
        ],
        out_shape=[
            jax.ShapeDtypeStruct((M, 1), jnp.int32),
            jax.ShapeDtypeStruct((mtiles, 8, GP), jnp.float32),
        ],
        scratch_shapes=[
            pltpu.VMEM((tm1, D), jnp.float32),               # Linear #1 accumulator
            pltpu.VMEM((tm1, 1), jnp.float32),               # row sum accumulator
            pltpu.VMEM((tm1, 1), jnp.float32),               # row sum-sq accumulator
        ],
        compiler_params=pltpu.CompilerParams(
            dimension_semantics=("parallel", "arbitrary"),   # megacore on v7x
            vmem_limit_bytes=vmem_limit),
    )(xv, w1t, b1, w2t, b2)

    # ---- tiny XLA glue: per-group stats -> per-row (a, b) -----------------
    stats = jnp.sum(stats_tiles, axis=0)                     # (8, GP)
    gsum = stats[0, :group]
    gsq = stats[1, :group]
    cnt = stats[2, :group] * float(D)                        # element counts
    mean_g = gsum / jnp.maximum(cnt, 1.0)
    var_g = (gsq - gsum * mean_g) / jnp.maximum(cnt - 1.0, 1.0)   # unbiased
    inv_g = jax.lax.rsqrt(var_g + eps)

    ridx = idx[:, 0]                                         # (M,) int32
    mean_row = jnp.take(mean_g, ridx)
    inv_row = jnp.take(inv_g, ridx)
    a_row = (inv_row * gamma_row[:, 0]).reshape(M, 1)
    b_row = (beta_row[:, 0] - mean_row * inv_row * gamma_row[:, 0]).reshape(M, 1)

    # ---- pass 2: lane-dense single-FMA normalize + affine -----------------
    td = _pick_tile(D, 2048, 128)
    rows_pref = max(8, min(M, (2 * 1024 * 1024) // max(td * 4, 1)))
    rows_pref = max(8, (rows_pref // 8) * 8)
    tm2 = _pick_tile(M, rows_pref, 8)
    out = pl.pallas_call(
        _scale_shift_kernel,
        grid=(M // tm2, D // td),
        in_specs=[
            pl.BlockSpec((tm2, td), lambda i, j: (i, j)),
            pl.BlockSpec((tm2, 1), lambda i, j: (i, 0)),
            pl.BlockSpec((tm2, 1), lambda i, j: (i, 0)),
        ],
        out_specs=pl.BlockSpec((tm2, td), lambda i, j: (i, j)),
        out_shape=jax.ShapeDtypeStruct((M, D), jnp.float32),
        compiler_params=pltpu.CompilerParams(
            dimension_semantics=("parallel", "parallel"),
            vmem_limit_bytes=vmem_limit),
    )(xv, a_row, b_row)

    return out.reshape(N, C, H, W)


# ---------------------------------------------------------------------------
# Pure-JAX reference mirroring the PyTorch forward.
# fc matmuls use the same bf16 MXU operand precision as the kernels (this
# only affects the discrete argmax near exact ties); all normalization math
# is f32, identical to the PyTorch semantics.
# ---------------------------------------------------------------------------
def _reference_forward(x, params, *, group, eps=1e-5):
    N, C, H, W = x.shape
    xv = x.reshape(N * C, H * W).astype(jnp.float32)
    h = jnp.dot(xv.astype(jnp.bfloat16), params["w1"].T.astype(jnp.bfloat16),
                preferred_element_type=jnp.float32) + params["b1"]
    logits = jnp.dot(h.astype(jnp.bfloat16), params["w2"].T.astype(jnp.bfloat16),
                     preferred_element_type=jnp.float32) + params["b2"]
    s = jnp.argmax(logits, axis=1)          # argmax(softmax(z)) == argmax(z)
    out = xv
    for g in range(group):
        mask = (s == g)
        cnt = jnp.sum(mask).astype(jnp.float32) * (H * W)
        bsum = jnp.sum(jnp.where(mask[:, None], xv, 0.0))
        bsq = jnp.sum(jnp.where(mask[:, None], xv * xv, 0.0))
        mean = bsum / jnp.maximum(cnt, 1.0)
        var = (bsq - bsum * mean) / jnp.maximum(cnt - 1.0, 1.0)
        norm = (xv - mean) / jnp.sqrt(var + eps)
        out = jnp.where(mask[:, None], norm, out)
    out = out.reshape(N, C, H, W)
    return out * params["weight"] + params["bias"]


if __name__ == "__main__":
    # Small shapes consistent with the module: width_height=16, group=4, C=4, N=2
    N, C, H, W = 2, 4, 16, 16
    GROUP = 4
    D = H * W

    key = jax.random.PRNGKey(0)
    kx, k1, k2, k3, k4, k5, k6 = jax.random.split(key, 7)

    x = jax.random.normal(kx, (N, C, H, W), jnp.float32)

    params = {
        "w1": jax.random.normal(k1, (D, D), jnp.float32) / jnp.sqrt(float(D)),
        "b1": jax.random.normal(k2, (D,), jnp.float32) * 0.01,
        "w2": jax.random.normal(k3, (GROUP, D), jnp.float32) / jnp.sqrt(float(D)),
        "b2": jax.random.normal(k4, (GROUP,), jnp.float32) * 0.01,
        # per-channel affine (module inits to ones/zeros; perturb to exercise it)
        "weight": (1.0 + 0.1 * jax.random.normal(k5, (1, C, 1, 1), jnp.float32)),
        "bias": 0.1 * jax.random.normal(k6, (1, C, 1, 1), jnp.float32),
    }

    fwd = jax.jit(proposed_ver_instance_forward,
                  static_argnames=("group", "eps", "force_two_pass"))

    # Default dispatch -> fused single-kernel fast path at these shapes.
    y_fused = jax.block_until_ready(fwd(x, params, group=GROUP, eps=1e-5))
    # Also exercise the two-pass (tiled) path.
    y_tiled = jax.block_until_ready(
        fwd(x, params, group=GROUP, eps=1e-5, force_two_pass=True))

    y_ref = jax.block_until_ready(
        _reference_forward(x, params, group=GROUP, eps=1e-5))

    assert y_fused.shape == (N, C, H, W)
    assert jnp.allclose(y_fused, y_ref, atol=2e-3, rtol=2e-3), "fused path mismatch"
    assert jnp.allclose(y_tiled, y_ref, atol=2e-3, rtol=2e-3), "two-pass path mismatch"

    print("KERNEL_OK")
</pallas_src>

<mosaic_0001>
module attributes {stable_mosaic.version = 11 : i64} {
  func.func @_fused_kernel(%arg0: i32, %arg1: memref<8x256xf32, #tpu.memory_space<vmem>>, %arg2: memref<256x256xbf16, #tpu.memory_space<vmem>>, %arg3: memref<1x256xf32, #tpu.memory_space<vmem>>, %arg4: memref<256x128xbf16, #tpu.memory_space<vmem>>, %arg5: memref<1x128xf32, #tpu.memory_space<vmem>>, %arg6: memref<8x1xf32, #tpu.memory_space<vmem>>, %arg7: memref<8x1xf32, #tpu.memory_space<vmem>>, %arg8: memref<8x256xf32, #tpu.memory_space<vmem>>) attributes {dimension_semantics = [#tpu.dimension_semantics<arbitrary>], iteration_bounds = array<i64: 1>, scalar_prefetch = 0 : i64, scratch_operands = 0 : i64, tpu.core_type = #tpu.core_type<tc>, window_params = [{pipeline_mode = #tpu.pipeline_mode<synchronous>, transform_indices = @transform_0, window_bounds = array<i64: 8, 256>}, {pipeline_mode = #tpu.pipeline_mode<synchronous>, transform_indices = @transform_1, window_bounds = array<i64: 256, 256>}, {pipeline_mode = #tpu.pipeline_mode<synchronous>, transform_indices = @transform_2, window_bounds = array<i64: 1, 256>}, {pipeline_mode = #tpu.pipeline_mode<synchronous>, transform_indices = @transform_3, window_bounds = array<i64: 256, 128>}, {pipeline_mode = #tpu.pipeline_mode<synchronous>, transform_indices = @transform_4, window_bounds = array<i64: 1, 128>}, {pipeline_mode = #tpu.pipeline_mode<synchronous>, transform_indices = @transform_5, window_bounds = array<i64: 8, 1>}, {pipeline_mode = #tpu.pipeline_mode<synchronous>, transform_indices = @transform_6, window_bounds = array<i64: 8, 1>}, {pipeline_mode = #tpu.pipeline_mode<synchronous>, transform_indices = @transform_7, window_bounds = array<i64: 8, 256>}]} {
    %c0 = arith.constant 0 : index
    %c0_0 = arith.constant 0 : index
    %0 = vector.load %arg1[%c0, %c0_0] : memref<8x256xf32, #tpu.memory_space<vmem>>, vector<8x256xf32>
    %1 = arith.truncf %0 : vector<8x256xf32> to vector<8x256xbf16>
    %c0_1 = arith.constant 0 : index
    %c0_2 = arith.constant 0 : index
    %2 = vector.load %arg2[%c0_1, %c0_2] : memref<256x256xbf16, #tpu.memory_space<vmem>>, vector<256x256xbf16>
    %cst = arith.constant dense<0.000000e+00> : vector<8x256xf32>
    %3 = tpu.matmul %1, %2, %cst {dimension_numbers = #tpu.dot_dimension_numbers<[1], [0], [0], [1], [0, 0, 1, 1], [], []>} : vector<8x256xbf16>, vector<256x256xbf16>, vector<8x256xf32> -> vector<8x256xf32>
    %c0_3 = arith.constant 0 : index
    %c0_4 = arith.constant 0 : index
    %4 = vector.load %arg3[%c0_3, %c0_4] : memref<1x256xf32, #tpu.memory_space<vmem>>, vector<1x256xf32>
    %5 = vector.broadcast %4 : vector<1x256xf32> to vector<8x256xf32>
    %6 = arith.addf %3, %5 : vector<8x256xf32>
    %7 = arith.truncf %6 : vector<8x256xf32> to vector<8x256xbf16>
    %c0_5 = arith.constant 0 : index
    %c0_6 = arith.constant 0 : index
    %8 = vector.load %arg4[%c0_5, %c0_6] : memref<256x128xbf16, #tpu.memory_space<vmem>>, vector<256x128xbf16>
    %cst_7 = arith.constant dense<0.000000e+00> : vector<8x128xf32>
    %9 = tpu.matmul %7, %8, %cst_7 {dimension_numbers = #tpu.dot_dimension_numbers<[1], [0], [0], [1], [0, 0, 1, 1], [], []>} : vector<8x256xbf16>, vector<256x128xbf16>, vector<8x128xf32> -> vector<8x128xf32>
    %c0_8 = arith.constant 0 : index
    %c0_9 = arith.constant 0 : index
    %10 = vector.load %arg5[%c0_8, %c0_9] : memref<1x128xf32, #tpu.memory_space<vmem>>, vector<1x128xf32>
    %11 = vector.broadcast %10 : vector<1x128xf32> to vector<8x128xf32>
    %12 = arith.addf %9, %11 : vector<8x128xf32>
    %13 = tpu.iota {dimensions = array<i32: 1>} : vector<8x128xi32>
    %c4_i32 = arith.constant 4 : i32
    %14 = vector.broadcast %c4_i32 : i32 to vector<8x128xi32>
    %15 = arith.cmpi slt, %13, %14 : vector<8x128xi32>
    %cst_10 = arith.constant -1.000000e+30 : f32
    %16 = vector.broadcast %cst_10 : f32 to vector<8x128xf32>
    %17 = arith.select %15, %12, %16 : vector<8x128xi1>, vector<8x128xf32>
    %cst_11 = arith.constant dense<0xFF800000> : vector<8xf32>
    %18 = vector.multi_reduction <maximumf>, %17, %cst_11 [1] : vector<8x128xf32> to vector<8xf32>
    %19 = vector.shape_cast %18 : vector<8xf32> to vector<8x1xf32>
    %20 = vector.broadcast %19 : vector<8x1xf32> to vector<8x128xf32>
    %21 = arith.cmpf oeq, %17, %20 : vector<8x128xf32>
    %c128_i32 = arith.constant 128 : i32
    %22 = vector.broadcast %c128_i32 : i32 to vector<8x128xi32>
    %23 = arith.select %21, %13, %22 : vector<8x128xi1>, vector<8x128xi32>
    %cst_12 = arith.constant dense<2147483647> : vector<8xi32>
    %24 = vector.multi_reduction <minsi>, %23, %cst_12 [1] : vector<8x128xi32> to vector<8xi32>
    %25 = vector.shape_cast %24 : vector<8xi32> to vector<8x1xi32>
    %26 = vector.broadcast %25 : vector<8x1xi32> to vector<8x128xi32>
    %27 = arith.cmpi eq, %13, %26 : vector<8x128xi32>
    %28 = arith.extui %27 : vector<8x128xi1> to vector<8x128xi32>
    %29 = arith.sitofp %28 : vector<8x128xi32> to vector<8x128xf32>
    %cst_13 = arith.constant dense<0.000000e+00> : vector<8xf32>
    %30 = vector.multi_reduction <add>, %0, %cst_13 [1] : vector<8x256xf32> to vector<8xf32>
    %31 = vector.shape_cast %30 : vector<8xf32> to vector<8x1xf32>
    %32 = arith.mulf %0, %0 : vector<8x256xf32>
    %cst_14 = arith.constant dense<0.000000e+00> : vector<8xf32>
    %33 = vector.multi_reduction <add>, %32, %cst_14 [1] : vector<8x256xf32> to vector<8xf32>
    %34 = vector.shape_cast %33 : vector<8xf32> to vector<8x1xf32>
    %35 = vector.broadcast %31 : vector<8x1xf32> to vector<8x128xf32>
    %36 = arith.mulf %29, %35 : vector<8x128xf32>
    %cst_15 = arith.constant dense<0.000000e+00> : vector<128xf32>
    %37 = vector.multi_reduction <add>, %36, %cst_15 [0] : vector<8x128xf32> to vector<128xf32>
    %38 = vector.shape_cast %37 : vector<128xf32> to vector<1x128xf32>
    %39 = vector.broadcast %34 : vector<8x1xf32> to vector<8x128xf32>
    %40 = arith.mulf %29, %39 : vector<8x128xf32>
    %cst_16 = arith.constant dense<0.000000e+00> : vector<128xf32>
    %41 = vector.multi_reduction <add>, %40, %cst_16 [0] : vector<8x128xf32> to vector<128xf32>
    %42 = vector.shape_cast %41 : vector<128xf32> to vector<1x128xf32>
    %cst_17 = arith.constant dense<0.000000e+00> : vector<128xf32>
    %43 = vector.multi_reduction <add>, %29, %cst_17 [0] : vector<8x128xf32> to vector<128xf32>
    %44 = vector.shape_cast %43 : vector<128xf32> to vector<1x128xf32>
    %cst_18 = arith.constant 2.560000e+02 : f32
    %45 = vector.broadcast %cst_18 : f32 to vector<1x128xf32>
    %46 = arith.mulf %44, %45 : vector<1x128xf32>
    %cst_19 = arith.constant 1.000000e+00 : f32
    %47 = vector.broadcast %cst_19 : f32 to vector<1x128xf32>
    %48 = arith.maximumf %46, %47 : vector<1x128xf32>
    %49 = arith.divf %38, %48 : vector<1x128xf32>
    %50 = arith.mulf %38, %49 : vector<1x128xf32>
    %51 = arith.subf %42, %50 : vector<1x128xf32>
    %cst_20 = arith.constant 1.000000e+00 : f32
    %52 = vector.broadcast %cst_20 : f32 to vector<1x128xf32>
    %53 = arith.subf %46, %52 : vector<1x128xf32>
    %cst_21 = arith.constant 1.000000e+00 : f32
    %54 = vector.broadcast %cst_21 : f32 to vector<1x128xf32>
    %55 = arith.maximumf %53, %54 : vector<1x128xf32>
    %56 = arith.divf %51, %55 : vector<1x128xf32>
    %cst_22 = arith.constant 9.99999974E-6 : f32
    %57 = vector.broadcast %cst_22 : f32 to vector<1x128xf32>
    %58 = arith.addf %56, %57 : vector<1x128xf32>
    %59 = math.rsqrt %58 : vector<1x128xf32>
    %60 = vector.broadcast %49 : vector<1x128xf32> to vector<8x128xf32>
    %61 = arith.mulf %29, %60 : vector<8x128xf32>
    %cst_23 = arith.constant dense<0.000000e+00> : vector<8xf32>
    %62 = vector.multi_reduction <add>, %61, %cst_23 [1] : vector<8x128xf32> to vector<8xf32>
    %63 = vector.shape_cast %62 : vector<8xf32> to vector<8x1xf32>
    %64 = vector.broadcast %59 : vector<1x128xf32> to vector<8x128xf32>
    %65 = arith.mulf %29, %64 : vector<8x128xf32>
    %cst_24 = arith.constant dense<0.000000e+00> : vector<8xf32>
    %66 = vector.multi_reduction <add>, %65, %cst_24 [1] : vector<8x128xf32> to vector<8xf32>
    %67 = vector.shape_cast %66 : vector<8xf32> to vector<8x1xf32>
    %c0_25 = arith.constant 0 : index
    %c0_26 = arith.constant 0 : index
    %68 = vector.load %arg6[%c0_25, %c0_26] : memref<8x1xf32, #tpu.memory_space<vmem>>, vector<8x1xf32>
    %69 = arith.mulf %67, %68 : vector<8x1xf32>
    %c0_27 = arith.constant 0 : index
    %c0_28 = arith.constant 0 : index
    %70 = vector.load %arg7[%c0_27, %c0_28] : memref<8x1xf32, #tpu.memory_space<vmem>>, vector<8x1xf32>
    %71 = arith.mulf %63, %69 : vector<8x1xf32>
    %72 = arith.subf %70, %71 : vector<8x1xf32>
    %73 = vector.broadcast %69 : vector<8x1xf32> to vector<8x256xf32>
    %74 = arith.mulf %0, %73 : vector<8x256xf32>
    %75 = vector.broadcast %72 : vector<8x1xf32> to vector<8x256xf32>
    %76 = arith.addf %74, %75 : vector<8x256xf32>
    %c0_29 = arith.constant 0 : index
    %c0_30 = arith.constant 0 : index
    %77 = vector.load %arg8[%c0_29, %c0_30] : memref<8x256xf32, #tpu.memory_space<vmem>>, vector<8x256xf32>
    tpu.vector_store %arg8[%c0_29, %c0_30], %76 {strides = array<i32>} : memref<8x256xf32, #tpu.memory_space<vmem>>, vector<8x256xf32>,
    return
  }
  func.func @transform_0(%arg0: i32) -> (i32, i32) {
    %c0_i32 = arith.constant 0 : i32
    %c0_i32_0 = arith.constant 0 : i32
    %c0_i32_1 = arith.constant 0 : i32
    return %c0_i32, %c0_i32_0 : i32, i32
  }
  func.func @transform_1(%arg0: i32) -> (i32, i32) {
    %c0_i32 = arith.constant 0 : i32
    %c0_i32_0 = arith.constant 0 : i32
    %c0_i32_1 = arith.constant 0 : i32
    return %c0_i32, %c0_i32_0 : i32, i32
  }
  func.func @transform_2(%arg0: i32) -> (i32, i32) {
    %c0_i32 = arith.constant 0 : i32
    %c0_i32_0 = arith.constant 0 : i32
    %c0_i32_1 = arith.constant 0 : i32
    return %c0_i32, %c0_i32_0 : i32, i32
  }
  func.func @transform_3(%arg0: i32) -> (i32, i32) {
    %c0_i32 = arith.constant 0 : i32
    %c0_i32_0 = arith.constant 0 : i32
    %c0_i32_1 = arith.constant 0 : i32
    return %c0_i32, %c0_i32_0 : i32, i32
  }
  func.func @transform_4(%arg0: i32) -> (i32, i32) {
    %c0_i32 = arith.constant 0 : i32
    %c0_i32_0 = arith.constant 0 : i32
    %c0_i32_1 = arith.constant 0 : i32
    return %c0_i32, %c0_i32_0 : i32, i32
  }
  func.func @transform_5(%arg0: i32) -> (i32, i32) {
    %c0_i32 = arith.constant 0 : i32
    %c0_i32_0 = arith.constant 0 : i32
    %c0_i32_1 = arith.constant 0 : i32
    return %c0_i32, %c0_i32_0 : i32, i32
  }
  func.func @transform_6(%arg0: i32) -> (i32, i32) {
    %c0_i32 = arith.constant 0 : i32
    %c0_i32_0 = arith.constant 0 : i32
    %c0_i32_1 = arith.constant 0 : i32
    return %c0_i32, %c0_i32_0 : i32, i32
  }
  func.func @transform_7(%arg0: i32) -> (i32, i32) {
    %c0_i32 = arith.constant 0 : i32
    %c0_i32_0 = arith.constant 0 : i32
    %c0_i32_1 = arith.constant 0 : i32
    return %c0_i32, %c0_i32_0 : i32, i32
  }
}

</mosaic_0001>

<llo_original>
// kernel: tile.14
$region0: #{tile.14}
  #allocation2 [shape = 's32[1]{0}', space=sflag, size = 0x4, scoped, tag = 'scoped memory for tile.14']
  %s0 = inlined_call_operand.hbm [shape: f32[4], index: 0, kind: input, shape index: {}]
  %s1 = inlined_call_operand.vmem [shape: f32[2,4], index: 1, kind: output, shape index: {}]
  $region1: #{tile.14} parent=0
    #allocation0 [shape = 'u8[512]{0}', space=vmem, size = 0x400, scoped, tag = 'operand span for operand 0']
    #allocation1 [shape = 's32[1]{0}', space=sflag, size = 0x4, scoped, tag = 'scoped memory for tile.14']
    %2 = vsyncpa [#allocation1], 0
    // Predicated region
    $region2: #{tile.14} parent=1 // pred_check
      _
    $region3: #{tile.14} parent=1 // pred_check_branch
      %4 = sbr.rel (0) target = $region5
    $region4: #{tile.14} parent=1 // pred_region
      %s6 = ssub.s32 16, 16
      %7 = vsyncadd [#allocation1], %s6
      %s9 = sshll.u32 [#allocation0], 4
      %s10 = int_to_ptr.vmem [resolvable:$true] %s9
      %12 = dma.hbm_to_vmem [thread:$0]  %s0, 16, %s10, [#allocation1]
    $region5: #{tile.14} parent=1 // pred_fallthru
      _
    // Predicated region
    $region6: #{tile.14} parent=1 // pred_check
      _
    $region7: #{tile.14} parent=1 // pred_check_branch
      %14 = sbr.rel (0) target = $region9
    $region8: #{tile.14} parent=1 // pred_region
      %15 = dma.done [#allocation1], 16
    $region9: #{tile.14} parent=1 // pred_fallthru
      _
    %v16 = vld [vmem:[#allocation0] ss:$0 sm:$0xff]
    %17 = vst [vmem:[%s1] sm:$0x3] %v16
    %18 = vsyncpa [#allocation1], 1

// kernel: tile.10
$region0: #{tile.10}
  #allocation0 [shape = 's32[1]{0}', space=sflag, size = 0x4, scoped, tag = 'scoped memory for tile.10']
  %s0 = inlined_call_operand.vmem [shape: f32[4], index: 0, kind: input, shape index: {}]
  %s1 = inlined_call_operand.vmem [shape: f32[2,4], index: 1, kind: output, shape index: {}]
  // Predicated region
  $region2: #{tile.10} parent=0 // pred_check
    _
  $region3: #{tile.10} parent=0 // pred_check_branch
    %3 = sbr.rel (0) target = $region5
  $region4: #{tile.10} parent=0 // pred_region
    _
  $region5: #{tile.10} parent=0 // pred_fallthru
    _
  %v4 = vld [vmem:[%s0] ss:$0 sm:$0xff]
  %5 = vst [vmem:[%s1] sm:$0x3] %v4

// kernel: tile.0
$region0: #{tile.0}
  %s0 = inlined_call_operand.vmem [shape: f32[2,4], index: 0, kind: input, shape index: {}]
  %s1 = inlined_call_operand.vmem [shape: f32[8,1], index: 1, kind: output, shape index: {}]
  $region1: #{tile.0} parent=0
    #allocation0 [shape = 'u8[4096]{0}', space=vmem, size = 0x1000, scoped, tag = 'scoped mem for input reshape']
    %s3 = sshll.u32 1, 2
    %s4 = ssub.s32 %s3, 1
    %v5 = vld [vmem:[%s0] sm:%s4]
    %6 = vst [vmem:[#allocation0] sm:%s4] %v5
    %v7 = vld [vmem:[#allocation0] sm:$0x3]
    %vm8 = vcmask 7168
    %9 = vst.msk [vmem:[%s1] ss:$4 sm:$0x3] %vm8, %v7
    %v10 = vld [vmem:[#allocation0] sm:$0x3]
    %11 = vrot.lane.b32.xlu0 %v10, 127
    %v12 = vpop.permute.xlu0 %11
    %vm13 = vcmask 7168
    %s14 = scalar_lea.vmem %s1, 1
    %15 = vst.msk [vmem:[%s14] ss:$4 sm:$0x3] %vm13, %v12
    %v16 = vld [vmem:[#allocation0] sm:$0x3]
    %17 = vrot.lane.b32.xlu0 %v16, 126
    %v18 = vpop.permute.xlu0 %17
    %vm19 = vcmask 7168
    %s20 = scalar_lea.vmem %s1, 2
    %21 = vst.msk [vmem:[%s20] ss:$4 sm:$0x3] %vm19, %v18
    %v22 = vld [vmem:[#allocation0] sm:$0x3]
    %23 = vrot.lane.b32.xlu0 %v22, 125
    %v24 = vpop.permute.xlu0 %23
    %vm25 = vcmask 7168
    %s26 = scalar_lea.vmem %s1, 3
    %27 = vst.msk [vmem:[%s26] ss:$4 sm:$0x3] %vm25, %v24

// kernel: proposed_ver_instance_forward.1
$region0: #{proposed_ver_instance_forward.1}
  #allocation0 [shape = 'u32[]', space=smem, size = 0x4, offset = 0x4, fixed_abs, tag = 'smem constant byte address 0x4 - core index']
  #allocation1 [shape = 'u32[144,128]{1,0:T(1,128)}', space=vmem, size = 0x12000, scoped, tag = 'internal scratch']
  %s0 = inlined_call_operand.vmem [shape: f32[8,256], index: 0, kind: input, shape index: {}]
  %s1 = inlined_call_operand.vmem [shape: bf16[256,256], index: 1, kind: input, shape index: {}]
  %s2 = inlined_call_operand.vmem [shape: f32[1,256], index: 2, kind: input, shape index: {}]
  %s3 = inlined_call_operand.vmem [shape: bf16[256,128], index: 3, kind: input, shape index: {}]
  %s4 = inlined_call_operand.vmem [shape: f32[1,128], index: 4, kind: input, shape index: {}]
  %s5 = inlined_call_operand.vmem [shape: f32[8,1], index: 5, kind: input, shape index: {}]
  %s6 = inlined_call_operand.vmem [shape: f32[8,1], index: 6, kind: input, shape index: {}]
  %s7 = inlined_call_operand.vmem [shape: f32[8,256], index: 7, kind: output, shape index: {}]
  %s8 = sld [smem:[#allocation0]]
  $region38: #{proposed_ver_instance_forward.1} parent=0
    _
  %s10 = ssub.s32 1, %s8
  %s11 = scalar_select 0, %s10, %s8
  // Predicated region
  $region2: #{proposed_ver_instance_forward.1} parent=0 // pred_check
    _
  $region3: #{proposed_ver_instance_forward.1} parent=0 // pred_check_branch
    %13 = sbr.rel (0) target = $region5
  $region4: #{proposed_ver_instance_forward.1} parent=0 // pred_region
    _
  $region5: #{proposed_ver_instance_forward.1} parent=0 // pred_fallthru
    _
  // Predicated region
  $region6: #{proposed_ver_instance_forward.1} parent=0 // pred_check
    _
  $region7: #{proposed_ver_instance_forward.1} parent=0 // pred_check_branch
    %15 = sbr.rel (0) target = $region9
  $region8: #{proposed_ver_instance_forward.1} parent=0 // pred_region
    _
  $region9: #{proposed_ver_instance_forward.1} parent=0 // pred_fallthru
    _
  // Predicated region
  $region10: #{proposed_ver_instance_forward.1} parent=0 // pred_check
    _
  $region11: #{proposed_ver_instance_forward.1} parent=0 // pred_check_branch
    %17 = sbr.rel (0) target = $region13
  $region12: #{proposed_ver_instance_forward.1} parent=0 // pred_region
    _
  $region13: #{proposed_ver_instance_forward.1} parent=0 // pred_fallthru
    _
  // Predicated region
  $region14: #{proposed_ver_instance_forward.1} parent=0 // pred_check
    _
  $region15: #{proposed_ver_instance_forward.1} parent=0 // pred_check_branch
    %19 = sbr.rel (0) target = $region17
  $region16: #{proposed_ver_instance_forward.1} parent=0 // pred_region
    _
  $region17: #{proposed_ver_instance_forward.1} parent=0 // pred_fallthru
    _
  // Predicated region
  $region18: #{proposed_ver_instance_forward.1} parent=0 // pred_check
    _
  $region19: #{proposed_ver_instance_forward.1} parent=0 // pred_check_branch
    %21 = sbr.rel (0) target = $region21
  $region20: #{proposed_ver_instance_forward.1} parent=0 // pred_region
    _
  $region21: #{proposed_ver_instance_forward.1} parent=0 // pred_fallthru
    _
  // Predicated region
  $region22: #{proposed_ver_instance_forward.1} parent=0 // pred_check
    _
  $region23: #{proposed_ver_instance_forward.1} parent=0 // pred_check_branch
    %23 = sbr.rel (0) target = $region25
  $region24: #{proposed_ver_instance_forward.1} parent=0 // pred_region
    _
  $region25: #{proposed_ver_instance_forward.1} parent=0 // pred_fallthru
    _
  // Predicated region
  $region26: #{proposed_ver_instance_forward.1} parent=0 // pred_check
    _
  $region27: #{proposed_ver_instance_forward.1} parent=0 // pred_check_branch
    %25 = sbr.rel (0) target = $region29
  $region28: #{proposed_ver_instance_forward.1} parent=0 // pred_region
    _
  $region29: #{proposed_ver_instance_forward.1} parent=0 // pred_fallthru
    _
  %v27 = vld [vmem:[%s0] sm:$0xff]
  %v28 = vld [vmem:[%s0 + $0x8] sm:$0xff]
  %v29 = vpack.c.bf16 %v27, %v27
  %v30 = vpack.c.bf16 %v28, %v28
  %v31 = vld [vmem:[%s1] sm:$0xff]
  %v32 = vld [vmem:[%s1 + $0x8] sm:$0xff]
  %v33 = vld [vmem:[%s1 + $0x10] sm:$0xff]
  %v34 = vld [vmem:[%s1 + $0x18] sm:$0xff]
  %v35 = vld [vmem:[%s1 + $0x20] sm:$0xff]
  %v36 = vld [vmem:[%s1 + $0x28] sm:$0xff]
  %v37 = vld [vmem:[%s1 + $0x30] sm:$0xff]
  %v38 = vld [vmem:[%s1 + $0x38] sm:$0xff]
  %v39 = vld [vmem:[%s1 + $0x40] sm:$0xff]
  %v40 = vld [vmem:[%s1 + $0x48] sm:$0xff]
  %v41 = vld [vmem:[%s1 + $0x50] sm:$0xff]
  %v42 = vld [vmem:[%s1 + $0x58] sm:$0xff]
  %v43 = vld [vmem:[%s1 + $0x60] sm:$0xff]
  %v44 = vld [vmem:[%s1 + $0x68] sm:$0xff]
  %v45 = vld [vmem:[%s1 + $0x70] sm:$0xff]
  %v46 = vld [vmem:[%s1 + $0x78] sm:$0xff]
  %v47 = vld [vmem:[%s1 + $0x80] sm:$0xff]
  %v48 = vld [vmem:[%s1 + $0x88] sm:$0xff]
  %v49 = vld [vmem:[%s1 + $0x90] sm:$0xff]
  %v50 = vld [vmem:[%s1 + $0x98] sm:$0xff]
  %v51 = vld [vmem:[%s1 + $0xa0] sm:$0xff]
  %v52 = vld [vmem:[%s1 + $0xa8] sm:$0xff]
  %v53 = vld [vmem:[%s1 + $0xb0] sm:$0xff]
  %v54 = vld [vmem:[%s1 + $0xb8] sm:$0xff]
  %v55 = vld [vmem:[%s1 + $0xc0] sm:$0xff]
  %v56 = vld [vmem:[%s1 + $0xc8] sm:$0xff]
  %v57 = vld [vmem:[%s1 + $0xd0] sm:$0xff]
  %v58 = vld [vmem:[%s1 + $0xd8] sm:$0xff]
  %v59 = vld [vmem:[%s1 + $0xe0] sm:$0xff]
  %v60 = vld [vmem:[%s1 + $0xe8] sm:$0xff]
  %v61 = vld [vmem:[%s1 + $0xf0] sm:$0xff]
  %v62 = vld [vmem:[%s1 + $0xf8] sm:$0xff]
  %v63 = vld [vmem:[%s2] sm:$0x3]
  %v65 = vlaneseq
  %v66 = vshrl.u32 %v65, 7
  %v67 = vsub.s32 0, %v66
  %v68 = vrot.slane %v63, %v67
  %v69 = vlaneseq
  %v70 = vshrl.u32 %v69, 7
  %v71 = vsub.s32 1, %v70
  %v72 = vrot.slane %v63, %v71
  %v107 = vunpack.c.l.b16 %v31
  %v108 = vunpack.c.h.b16 %v31
  %v109 = vunpack.c.l.b16 %v32
  %v110 = vunpack.c.h.b16 %v32
  %v111 = vunpack.c.l.b16 %v33
  %v112 = vunpack.c.h.b16 %v33
  %v113 = vunpack.c.l.b16 %v34
  %v114 = vunpack.c.h.b16 %v34
  %v115 = vunpack.c.l.b16 %v35
  %v116 = vunpack.c.h.b16 %v35
  %v117 = vunpack.c.l.b16 %v36
  %v118 = vunpack.c.h.b16 %v36
  %v119 = vunpack.c.l.b16 %v37
  %v120 = vunpack.c.h.b16 %v37
  %v121 = vunpack.c.l.b16 %v38
  %v122 = vunpack.c.h.b16 %v38
  %v123 = vunpack.c.l.b16 %v39
  %v124 = vunpack.c.h.b16 %v39
  %v125 = vunpack.c.l.b16 %v40
  %v126 = vunpack.c.h.b16 %v40
  %v127 = vunpack.c.l.b16 %v41
  %v128 = vunpack.c.h.b16 %v41
  %v129 = vunpack.c.l.b16 %v42
  %v130 = vunpack.c.h.b16 %v42
  %v131 = vunpack.c.l.b16 %v43
  %v132 = vunpack.c.h.b16 %v43
  %v133 = vunpack.c.l.b16 %v44
  %v134 = vunpack.c.h.b16 %v44
  %v135 = vunpack.c.l.b16 %v45
  %v136 = vunpack.c.h.b16 %v45
  %v137 = vunpack.c.l.b16 %v46
  %v138 = vunpack.c.h.b16 %v46
  %v139 = vunpack.c.l.b16 %v47
  %v140 = vunpack.c.h.b16 %v47
  %v141 = vunpack.c.l.b16 %v48
  %v142 = vunpack.c.h.b16 %v48
  %v143 = vunpack.c.l.b16 %v49
  %v144 = vunpack.c.h.b16 %v49
  %v145 = vunpack.c.l.b16 %v50
  %v146 = vunpack.c.h.b16 %v50
  %v147 = vunpack.c.l.b16 %v51
  %v148 = vunpack.c.h.b16 %v51
  %v149 = vunpack.c.l.b16 %v52
  %v150 = vunpack.c.h.b16 %v52
  %v151 = vunpack.c.l.b16 %v53
  %v152 = vunpack.c.h.b16 %v53
  %v153 = vunpack.c.l.b16 %v54
  %v154 = vunpack.c.h.b16 %v54
  %v155 = vunpack.c.l.b16 %v55
  %v156 = vunpack.c.h.b16 %v55
  %v157 = vunpack.c.l.b16 %v56
  %v158 = vunpack.c.h.b16 %v56
  %v159 = vunpack.c.l.b16 %v57
  %v160 = vunpack.c.h.b16 %v57
  %v161 = vunpack.c.l.b16 %v58
  %v162 = vunpack.c.h.b16 %v58
  %v163 = vunpack.c.l.b16 %v59
  %v164 = vunpack.c.h.b16 %v59
  %v165 = vunpack.c.l.b16 %v60
  %v166 = vunpack.c.h.b16 %v60
  %v167 = vunpack.c.l.b16 %v61
  %v168 = vunpack.c.h.b16 %v61
  %v169 = vunpack.c.l.b16 %v62
  %v170 = vunpack.c.h.b16 %v62
  %v171 = vpack.c.b16 %v109, %v107
  %v172 = vpack.c.b16 %v110, %v108
  %v173 = vpack.c.b16 %v113, %v111
  %v174 = vpack.c.b16 %v114, %v112
  %v175 = vpack.c.b16 %v117, %v115
  %v176 = vpack.c.b16 %v118, %v116
  %v177 = vpack.c.b16 %v121, %v119
  %v178 = vpack.c.b16 %v122, %v120
  %v179 = vpack.c.b16 %v125, %v123
  %v180 = vpack.c.b16 %v126, %v124
  %v181 = vpack.c.b16 %v129, %v127
  %v182 = vpack.c.b16 %v130, %v128
  %v183 = vpack.c.b16 %v133, %v131
  %v184 = vpack.c.b16 %v134, %v132
  %v185 = vpack.c.b16 %v137, %v135
  %v186 = vpack.c.b16 %v138, %v136
  %v187 = vpack.c.b16 %v141, %v139
  %v188 = vpack.c.b16 %v142, %v140
  %v189 = vpack.c.b16 %v145, %v143
  %v190 = vpack.c.b16 %v146, %v144
  %v191 = vpack.c.b16 %v149, %v147
  %v192 = vpack.c.b16 %v150, %v148
  %v193 = vpack.c.b16 %v153, %v151
  %v194 = vpack.c.b16 %v154, %v152
  %v195 = vpack.c.b16 %v157, %v155
  %v196 = vpack.c.b16 %v158, %v156
  %v197 = vpack.c.b16 %v161, %v159
  %v198 = vpack.c.b16 %v162, %v160
  %v199 = vpack.c.b16 %v165, %v163
  %v200 = vpack.c.b16 %v166, %v164
  %v201 = vpack.c.b16 %v169, %v167
  %v202 = vpack.c.b16 %v170, %v168
  %235 = vmatprep.subr.bf16.mxu0 %v186
  %236 = vmatpush1.bf16.msra.mxu0 %v185
  %237 = vmatprep.subr.bf16.mxu0 %v184
  %238 = vmatpush1.bf16.msra.mxu0 %v183
  %239 = vmatprep.subr.bf16.mxu0 %v182
  %240 = vmatpush1.bf16.msra.mxu0 %v181
  %241 = vmatprep.subr.bf16.mxu0 %v180
  %242 = vmatpush1.bf16.msra.mxu0 %v179
  %243 = vmatprep.subr.bf16.mxu0 %v178
  %244 = vmatpush1.bf16.msra.mxu0 %v177
  %245 = vmatprep.subr.bf16.mxu0 %v176
  %246 = vmatpush1.bf16.msra.mxu0 %v175
  %247 = vmatprep.subr.bf16.mxu0 %v174
  %248 = vmatpush1.bf16.msra.mxu0 %v173
  %249 = vmatprep.subr.bf16.mxu0 %v172
  %250 = vmatpush1.bf16.msra.mxu0 %v171
  %251 = vmatprep.subr.bf16.mxu0 %v202
  %252 = vmatpush2.bf16.msra.mxu0 %v201
  %253 = vmatprep.subr.bf16.mxu0 %v200
  %254 = vmatpush2.bf16.msra.mxu0 %v199
  %255 = vmatprep.subr.bf16.mxu0 %v198
  %256 = vmatpush2.bf16.msra.mxu0 %v197
  %257 = vmatprep.subr.bf16.mxu0 %v196
  %258 = vmatpush2.bf16.msra.mxu0 %v195
  %259 = vmatprep.subr.bf16.mxu0 %v194
  %260 = vmatpush2.bf16.msra.mxu0 %v193
  %261 = vmatprep.subr.bf16.mxu0 %v192
  %262 = vmatpush2.bf16.msra.mxu0 %v191
  %263 = vmatprep.subr.bf16.mxu0 %v190
  %264 = vmatpush2.bf16.msra.mxu0 %v189
  %265 = vmatprep.subr.bf16.mxu0 %v188
  %266 = vmatpush2.bf16.msra.mxu0 %v187
  %267 = vmatprep.mubr.bf16.mxu0 %v30
  %268 = vmatmul.mubr.bf16.gmra.mxu0 %v29
  %v269 = vpop.f32.mrf.mxu0
  %v270 = vadd.f32 %v68, %v269
  %v271 = vpop.f32.mrf.mxu0
  %v272 = vadd.f32 %v72, %v271
  %v273 = vpop.f32.mrf.mxu0
  %v274 = vpop.f32.mrf.mxu0
  %275 = vdwg.mxu0
  %v276 = vpack.c.bf16 %v270, %v270
  %v277 = vpack.c.bf16 %v272, %v272
  %v278 = vld [vmem:[%s3] sm:$0xf]
  %v279 = vld [vmem:[%s3 + $0x4] sm:$0xf]
  %v280 = vld [vmem:[%s3 + $0x8] sm:$0xf]
  %v281 = vld [vmem:[%s3 + $0xc] sm:$0xf]
  %v282 = vld [vmem:[%s3 + $0x10] sm:$0xf]
  %v283 = vld [vmem:[%s3 + $0x14] sm:$0xf]
  %v284 = vld [vmem:[%s3 + $0x18] sm:$0xf]
  %v285 = vld [vmem:[%s3 + $0x1c] sm:$0xf]
  %v286 = vld [vmem:[%s3 + $0x20] sm:$0xf]
  %v287 = vld [vmem:[%s3 + $0x24] sm:$0xf]
  %v288 = vld [vmem:[%s3 + $0x28] sm:$0xf]
  %v289 = vld [vmem:[%s3 + $0x2c] sm:$0xf]
  %v290 = vld [vmem:[%s3 + $0x30] sm:$0xf]
  %v291 = vld [vmem:[%s3 + $0x34] sm:$0xf]
  %v292 = vld [vmem:[%s3 + $0x38] sm:$0xf]
  %v293 = vld [vmem:[%s3 + $0x3c] sm:$0xf]
  %v294 = vld [vmem:[%s3 + $0x40] sm:$0xf]
  %v295 = vld [vmem:[%s3 + $0x44] sm:$0xf]
  %v296 = vld [vmem:[%s3 + $0x48] sm:$0xf]
  %v297 = vld [vmem:[%s3 + $0x4c] sm:$0xf]
  %v298 = vld [vmem:[%s3 + $0x50] sm:$0xf]
  %v299 = vld [vmem:[%s3 + $0x54] sm:$0xf]
  %v300 = vld [vmem:[%s3 + $0x58] sm:$0xf]
  %v301 = vld [vmem:[%s3 + $0x5c] sm:$0xf]
  %v302 = vld [vmem:[%s3 + $0x60] sm:$0xf]
  %v303 = vld [vmem:[%s3 + $0x64] sm:$0xf]
  %v304 = vld [vmem:[%s3 + $0x68] sm:$0xf]
  %v305 = vld [vmem:[%s3 + $0x6c] sm:$0xf]
  %v306 = vld [vmem:[%s3 + $0x70] sm:$0xf]
  %v307 = vld [vmem:[%s3 + $0x74] sm:$0xf]
  %v308 = vld [vmem:[%s3 + $0x78] sm:$0xf]
  %v309 = vld [vmem:[%s3 + $0x7c] sm:$0xf]
  %v310 = vld [vmem:[%s4] sm:$0x1]
  %v312 = vlaneseq
  %v313 = vshrl.u32 %v312, 7
  %v314 = vsub.s32 0, %v313
  %v315 = vrot.slane %v310, %v314
  %v349 = vunpack.c.l.b16 %v278
  %v350 = vunpack.c.l.b16 %v279
  %v351 = vunpack.c.l.b16 %v280
  %v352 = vunpack.c.l.b16 %v281
  %v353 = vunpack.c.l.b16 %v282
  %v354 = vunpack.c.l.b16 %v283
  %v355 = vunpack.c.l.b16 %v284
  %v356 = vunpack.c.l.b16 %v285
  %v357 = vunpack.c.l.b16 %v286
  %v358 = vunpack.c.l.b16 %v287
  %v359 = vunpack.c.l.b16 %v288
  %v360 = vunpack.c.l.b16 %v289
  %v361 = vunpack.c.l.b16 %v290
  %v362 = vunpack.c.l.b16 %v291
  %v363 = vunpack.c.l.b16 %v292
  %v364 = vunpack.c.l.b16 %v293
  %v365 = vunpack.c.l.b16 %v294
  %v366 = vunpack.c.l.b16 %v295
  %v367 = vunpack.c.l.b16 %v296
  %v368 = vunpack.c.l.b16 %v297
  %v369 = vunpack.c.l.b16 %v298
  %v370 = vunpack.c.l.b16 %v299
  %v371 = vunpack.c.l.b16 %v300
  %v372 = vunpack.c.l.b16 %v301
  %v373 = vunpack.c.l.b16 %v302
  %v374 = vunpack.c.l.b16 %v303
  %v375 = vunpack.c.l.b16 %v304
  %v376 = vunpack.c.l.b16 %v305
  %v377 = vunpack.c.l.b16 %v306
  %v378 = vunpack.c.l.b16 %v307
  %v379 = vunpack.c.l.b16 %v308
  %v380 = vunpack.c.l.b16 %v309
  %v381 = vpack.c.b16 %v350, %v349
  %v382 = vpack.c.b16 %v352, %v351
  %v383 = vpack.c.b16 %v354, %v353
  %v384 = vpack.c.b16 %v356, %v355
  %v385 = vpack.c.b16 %v358, %v357
  %v386 = vpack.c.b16 %v360, %v359
  %v387 = vpack.c.b16 %v362, %v361
  %v388 = vpack.c.b16 %v364, %v363
  %v389 = vpack.c.b16 %v366, %v365
  %v390 = vpack.c.b16 %v368, %v367
  %v391 = vpack.c.b16 %v370, %v369
  %v392 = vpack.c.b16 %v372, %v371
  %v393 = vpack.c.b16 %v374, %v373
  %v394 = vpack.c.b16 %v376, %v375
  %v395 = vpack.c.b16 %v378, %v377
  %v396 = vpack.c.b16 %v380, %v379
  %413 = vmatprep.subr.bf16.mxu0 0
  %414 = vmatpush1.bf16.msra.mxu0 %v388
  %415 = vmatprep.subr.bf16.mxu0 0
  %416 = vmatpush1.bf16.msra.mxu0 %v387
  %417 = vmatprep.subr.bf16.mxu0 0
  %418 = vmatpush1.bf16.msra.mxu0 %v386
  %419 = vmatprep.subr.bf16.mxu0 0
  %420 = vmatpush1.bf16.msra.mxu0 %v385
  %421 = vmatprep.subr.bf16.mxu0 0
  %422 = vmatpush1.bf16.msra.mxu0 %v384
  %423 = vmatprep.subr.bf16.mxu0 0
  %424 = vmatpush1.bf16.msra.mxu0 %v383
  %425 = vmatprep.subr.bf16.mxu0 0
  %426 = vmatpush1.bf16.msra.mxu0 %v382
  %427 = vmatprep.subr.bf16.mxu0 0
  %428 = vmatpush1.bf16.msra.mxu0 %v381
  %429 = vmatprep.subr.bf16.mxu0 0
  %430 = vmatpush2.bf16.msra.mxu0 %v396
  %431 = vmatprep.subr.bf16.mxu0 0
  %432 = vmatpush2.bf16.msra.mxu0 %v395
  %433 = vmatprep.subr.bf16.mxu0 0
  %434 = vmatpush2.bf16.msra.mxu0 %v394
  %435 = vmatprep.subr.bf16.mxu0 0
  %436 = vmatpush2.bf16.msra.mxu0 %v393
  %437 = vmatprep.subr.bf16.mxu0 0
  %438 = vmatpush2.bf16.msra.mxu0 %v392
  %439 = vmatprep.subr.bf16.mxu0 0
  %440 = vmatpush2.bf16.msra.mxu0 %v391
  %441 = vmatprep.subr.bf16.mxu0 0
  %442 = vmatpush2.bf16.msra.mxu0 %v390
  %443 = vmatprep.subr.bf16.mxu0 0
  %444 = vmatpush2.bf16.msra.mxu0 %v389
  %445 = vmatprep.mubr.bf16.mxu0 %v277
  %446 = vmatmul.mubr.bf16.gmra.mxu0 %v276
  %v447 = vpop.f32.mrf.mxu0
  %v448 = vadd.f32 %v315, %v447
  %v449 = vpop.f32.mrf.mxu0
  %v450 = vpop.f32.mrf.mxu0
  %v451 = vpop.f32.mrf.mxu0
  %452 = vdwg.mxu0
  %v453 = vlaneseq
  %v454 = vand.u32 %v453, 127
  %vm455 = vcmp.lt.s32.totalorder %v454, 4
  %v456 = vsel %vm455, %v448, -1e+30
  %457 = vmax.xlane.f32.xlu0 %v456
  %v458 = vpop.xlane.xlu0 %457
  %vm459 = vcmp.eq.f32.partialorder %v456, %v458
  %v460 = vsel %vm459, %v454, 128
  %v461 = vand.u32 %v460, 65535
  %v462 = vshra.s32 %v460, 16
  %v463 = vcvt.s32.f32 %v461
  %v464 = vcvt.s32.f32 %v462
  %465 = vmin.xlane.f32.xlu0 %v464
  %v466 = vpop.xlane.xlu0 %465
  %vm467 = vcmp.eq.f32.partialorder %v464, %v466
  %v468 = vsel %vm467, %v463, inf
  %469 = vmin.xlane.f32.xlu0 %v468
  %v470 = vpop.xlane.xlu0 %469
  %v471 = vcvt.f32.s32 %v470
  %v472 = vcvt.f32.s32 %v466
  %v473 = vshll.u32 %v472, 16
  %v474 = vadd.s32 %v473, %v471
  %vm475 = vcmp.eq.s32.totalorder %v454, %v474
  %v476 = vsel %vm475, 1, 0
  %v477 = vcvt.s32.f32 %v476
  %v478 = vadd.f32 %v27, %v28
  %479 = vadd.xlane.f32.xlu0 %v478
  %v480 = vpop.xlane.xlu0 %479
  %v481 = vmul.f32 %v27, %v27
  %v482 = vmul.f32 %v28, %v28
  %v483 = vadd.f32 %v481, %v482
  %484 = vadd.xlane.f32.xlu0 %v483
  %v485 = vpop.xlane.xlu0 %484
  %v486 = vmul.f32 %v477, %v480
  %v487 = vrot.slane %v486, 4
  %v488 = vadd.f32 %v486, %v487
  %v489 = vrot.slane %v488, 2
  %v490 = vadd.f32 %v488, %v489
  %v491 = vrot.slane %v490, 1
  %v492 = vadd.f32 %v490, %v491
  %v493 = vmul.f32 %v477, %v485
  %v494 = vrot.slane %v493, 4
  %v495 = vadd.f32 %v493, %v494
  %v496 = vrot.slane %v495, 2
  %v497 = vadd.f32 %v495, %v496
  %v498 = vrot.slane %v497, 1
  %v499 = vadd.f32 %v497, %v498
  %v500 = vrot.slane %v477, 4
  %v501 = vadd.f32 %v477, %v500
  %v502 = vrot.slane %v501, 2
  %v503 = vadd.f32 %v501, %v502
  %v504 = vrot.slane %v503, 1
  %v505 = vadd.f32 %v503, %v504
  %v506 = vmul.f32 %v505, 256.0
  %v507 = vmax.f32 %v506, 1.0
  %v508 = vrcp.pop %v507
  %v509 = vmul.f32 %v492, %v508
  %v510 = vmul.f32 %v492, %v509
  %v511 = vsub.f32 %v499, %v510
  %v512 = vsub.f32 %v506, 1.0
  %v513 = vmax.f32 %v512, 1.0
  %v514 = vrcp.pop %v513
  %v515 = vmul.f32 %v511, %v514
  %v516 = vadd.f32 %v515, 1e-05
  %v517 = vrsqrt.pop %v516
  %v518 = vmul.f32 %v477, %v509
  %519 = vadd.xlane.f32.xlu0 %v518
  %v520 = vpop.xlane.xlu0 %519
  %v521 = vmul.f32 %v477, %v517
  %522 = vadd.xlane.f32.xlu0 %v521
  %v523 = vpop.xlane.xlu0 %522
  %v524 = vld [vmem:[%s5] sm:$0xff]
  %v525 = vmul.f32 %v523, %v524
  %v526 = vld [vmem:[%s6] sm:$0xff]
  %v527 = vmul.f32 %v520, %v525
  %v528 = vsub.f32 %v526, %v527
  %530 = vset.pattern.permute.xlu0 0
  %531 = vperm.xlu0 %530, %v525
  %v532 = vpop.permute.xlu0 %531
  %v534 = vmul.f32 %v27, %v532
  %v535 = vmul.f32 %v28, %v532
  %537 = vset.pattern.permute.xlu0 0
  %538 = vperm.xlu0 %537, %v528
  %v539 = vpop.permute.xlu0 %538
  %v541 = vadd.f32 %v534, %v539
  %v542 = vadd.f32 %v535, %v539
  %543 = vst [vmem:[%s7] sm:$0xff] %v541
  %544 = vst [vmem:[%s7 + $0x8] sm:$0xff] %v542
  // Predicated region
  $region30: #{proposed_ver_instance_forward.1} parent=0 // pred_check
    _
  $region31: #{proposed_ver_instance_forward.1} parent=0 // pred_check_branch
    %546 = sbr.rel (0) target = $region33
  $region32: #{proposed_ver_instance_forward.1} parent=0 // pred_region
    _
  $region33: #{proposed_ver_instance_forward.1} parent=0 // pred_fallthru
    _
  // Predicated region
  $region34: #{proposed_ver_instance_forward.1} parent=0 // pred_check
    _
  $region35: #{proposed_ver_instance_forward.1} parent=0 // pred_check_branch
    %548 = sbr.rel (0) target = $region37
  $region36: #{proposed_ver_instance_forward.1} parent=0 // pred_region
    _
  $region37: #{proposed_ver_instance_forward.1} parent=0 // pred_fallthru
    _

</llo_original>
